<compile_context>
chip_gen: v7x
topology: tpu7x:2x2x1
jax: 0.10.0
libtpu: 0.0.40
codegen_flags: <defaults>
</compile_context>

<pallas_src>
import functools

import jax
import jax.numpy as jnp
from jax.experimental import pallas as pl
from jax.experimental.pallas import tpu as pltpu


def _round_up(n, m):
    return (n + m - 1) // m * m


def temporal_attention_kernel(x_ref, wqk_ref, bqk_ref, wscat_ref, bs_ref,
                              wv_ref, bv_ref, out_ref, *, valid_seq_len):
    bb, s_pad, h_pad = x_ref.shape

    x = x_ref[...]                                          # (bb, S_pad, H_pad)
    # Free view: S_pad % 8 == 0 is guaranteed by the wrapper, so collapsing the
    # leading dims does not trigger a VMEM repack.
    x2d = x.reshape(bb * s_pad, h_pad)

    # Fused Q/K projection: one MXU matmul, lane-full (bb*S_pad, 2*A_pad).
    qk = jnp.tanh(
        jnp.dot(x2d, wqk_ref[...], preferred_element_type=jnp.float32)
        + bqk_ref[...])

    # Score Linear(A, 1): broadcast-multiply with the duplicated weight row
    # [ws|ws] + one lane reduction  ==  (tanh(q) + tanh(k)) @ ws^T.
    scores = (jnp.sum(qk * wscat_ref[...], axis=-1, keepdims=True)
              + bs_ref[0, 0])                               # (bb*S_pad, 1)
    scores = scores.reshape(bb, s_pad, 1)

    # Static path: only emitted when the wrapper actually padded S.
    if s_pad != valid_seq_len:
        pos = jax.lax.broadcasted_iota(jnp.int32, (s_pad, 1), 0)
        scores = jnp.where((pos < valid_seq_len)[None], scores, -1e30)

    # Softmax over the sequence axis. Exact division (perf review: the approx
    # reciprocal saved ~nothing and was the source of the accuracy loss).
    m = jnp.max(scores, axis=1, keepdims=True)              # (bb, 1, 1)
    e = jnp.exp(scores - m)                                 # (bb, S_pad, 1)
    denom = jnp.sum(e, axis=1)                              # (bb, 1)

    # Attention pooling BEFORE the V projection, normalized exactly.
    pooled = jnp.sum(e * x, axis=1) / denom                 # (bb, H_pad)

    # Deferred V projection; softmax weights sum to 1, so adding bv once is
    # exact:  sum_s attn_s (x_s @ Wv + bv) == (sum_s attn_s x_s) @ Wv + bv.
    out = (jnp.dot(pooled.astype(wv_ref.dtype), wv_ref[...],
                   preferred_element_type=jnp.float32)
           + bv_ref[...])                                   # (bb, H_pad)
    out_ref[...] = out[None].astype(out_ref.dtype)          # (1, bb, H_pad)


def temporal_attention(x, wq, bq, wk, bk, wv, bv, ws, bs, *,
                       batch_block=None, use_bf16=False):
    """x: (B, S, H) float32.

    Weights are stored pre-transposed as (in_features, out_features):
      wq, wk: (H, A);  bq, bk: (1, A);  wv: (H, H);  bv: (1, H)
      ws: (1, A)  (score weight, out_features=1);  bs: (1, 1)
    """
    B, S, H = x.shape
    A = wq.shape[1]

    # ---- host-side padding to lane/sublane-dense shapes -------------------
    H_pad = _round_up(H, 128)     # lane-dense feature/output dim
    S_pad = _round_up(S, 8)       # sublane-aligned -> in-kernel flatten is free
    A_pad = _round_up(A, 64)      # fused QK width 2*A_pad is a multiple of 128

    x_p = jnp.pad(x, ((0, 0), (0, S_pad - S), (0, H_pad - H)))
    wq_p = jnp.pad(wq, ((0, H_pad - H), (0, A_pad - A)))
    wk_p = jnp.pad(wk, ((0, H_pad - H), (0, A_pad - A)))
    bq_p = jnp.pad(bq, ((0, 0), (0, A_pad - A)))
    bk_p = jnp.pad(bk, ((0, 0), (0, A_pad - A)))
    ws_p = jnp.pad(ws, ((0, 0), (0, A_pad - A)))
    wv_p = jnp.pad(wv, ((0, H_pad - H), (0, H_pad - H)))
    bv_p = jnp.pad(bv, ((0, 0), (0, H_pad - H)))

    wqk = jnp.concatenate([wq_p, wk_p], axis=1)       # (H_pad, 2*A_pad)
    bqk = jnp.concatenate([bq_p, bk_p], axis=1)       # (1, 2*A_pad)
    wscat = jnp.concatenate([ws_p, ws_p], axis=1)     # (1, 2*A_pad)

    if use_bf16:
        # MXU operands only (HBM-bound path on v6e/v7x); accumulation,
        # biases and softmax stay float32. Not used by the demo check.
        x_p = x_p.astype(jnp.bfloat16)
        wqk = wqk.astype(jnp.bfloat16)
        wv_p = wv_p.astype(jnp.bfloat16)

    # ---- grid sizing: >=2 (ideally >=4) steps so the x DMA overlaps compute
    # and v7x's second TensorCore gets work on the "parallel" batch axis.
    # For large B prefer batch_block*S_pad as a multiple of 256 (MXU M dim).
    if batch_block is None:
        target = 4 if B >= 4 else min(2, B)
        batch_block = max(d for d in range(1, B + 1)
                          if B % d == 0 and B // d >= target)
    assert B % batch_block == 0
    num_blocks = B // batch_block
    A2 = 2 * A_pad

    # ---- explicit VMEM budget (v5e scoped default is 16 MiB, v7x has 64 MiB
    # physical): 2x double-buffered x/out tiles + weights + in-kernel temps.
    itemsize = 2 if use_bf16 else 4
    x_tile = batch_block * S_pad * H_pad * itemsize
    out_tile = batch_block * H_pad * 4
    weights = (H_pad * A2 + H_pad * H_pad) * itemsize + (3 * A2 + 2 * H_pad) * 4
    temps = 4 * batch_block * S_pad * max(A2, H_pad) * 4
    vmem_limit = int(min(100 * 2**20,
                         max(32 * 2**20,
                             2 * (2 * (x_tile + out_tile) + 2 * weights + temps))))

    kernel = functools.partial(temporal_attention_kernel, valid_seq_len=S)

    out = pl.pallas_call(
        kernel,
        out_shape=jax.ShapeDtypeStruct((num_blocks, batch_block, H_pad),
                                       jnp.float32),
        grid_spec=pltpu.PrefetchScalarGridSpec(
            num_scalar_prefetch=0,
            grid=(num_blocks,),
            in_specs=[
                pl.BlockSpec((batch_block, S_pad, H_pad),
                             lambda b: (b, 0, 0)),                 # x
                # Grid-invariant weights (constant index_map). Single-buffering
                # them (pl.Buffered(1)) would save <300 KiB here, so we keep
                # the default pipelining and spend the VMEM on bigger x tiles.
                pl.BlockSpec((H_pad, A2), lambda b: (0, 0)),        # [Wq|Wk]
                pl.BlockSpec((1, A2), lambda b: (0, 0)),            # [bq|bk]
                pl.BlockSpec((1, A2), lambda b: (0, 0)),            # [ws|ws]
                pl.BlockSpec(memory_space=pltpu.MemorySpace.SMEM),  # bs scalar
                pl.BlockSpec((H_pad, H_pad), lambda b: (0, 0)),     # Wv
                pl.BlockSpec((1, H_pad), lambda b: (0, 0)),         # bv
            ],
            out_specs=pl.BlockSpec((1, batch_block, H_pad),
                                   lambda b: (b, 0, 0)),
        ),
        compiler_params=pltpu.CompilerParams(
            dimension_semantics=("parallel",),
            vmem_limit_bytes=vmem_limit),
    )(x_p, wqk, bqk, wscat, bs, wv_p, bv_p)

    # Lane-dense (B, H_pad) slab -> strip the feature padding.
    return out.reshape(B, H_pad)[:, :H]


def reference(x, wq, bq, wk, bk, wv, bv, ws, bs):
    """Pure-JAX mirror of the PyTorch forward, f32-exact matmuls (HIGHEST)."""
    P = jax.lax.Precision.HIGHEST
    q = jnp.tanh(jnp.einsum('bsh,ha->bsa', x, wq, precision=P) + bq)
    k = jnp.tanh(jnp.einsum('bsh,ha->bsa', x, wk, precision=P) + bk)
    scores = jnp.einsum('bsa,a->bs', q + k, ws[0], precision=P)[..., None] + bs[0, 0]
    attn = jax.nn.softmax(scores, axis=1)                       # softmax over seq
    v = jnp.einsum('bsh,hd->bsd', x, wv, precision=P) + bv
    return jnp.einsum('bs,bsh->bh', attn[..., 0], v, precision=P)


if __name__ == "__main__":
    B, S, H, A = 2, 8, 32, 64

    key = jax.random.PRNGKey(0)
    ks = jax.random.split(key, 10)

    x = jax.random.normal(ks[0], (B, S, H), dtype=jnp.float32)

    # Deterministic synthetic parameters; shapes match the nn.Linear layers,
    # stored pre-transposed as (in_features, out_features).
    wq = jax.random.normal(ks[1], (H, A), dtype=jnp.float32) * 0.1
    bq = jax.random.normal(ks[2], (1, A), dtype=jnp.float32) * 0.1
    wk = jax.random.normal(ks[3], (H, A), dtype=jnp.float32) * 0.1
    bk = jax.random.normal(ks[4], (1, A), dtype=jnp.float32) * 0.1
    wv = jax.random.normal(ks[5], (H, H), dtype=jnp.float32) * 0.1
    bv = jax.random.normal(ks[6], (1, H), dtype=jnp.float32) * 0.1
    ws = jax.random.normal(ks[7], (1, A), dtype=jnp.float32) * 0.1   # score weight
    bs = jax.random.normal(ks[8], (1, 1), dtype=jnp.float32) * 0.1   # score bias

    out = temporal_attention(x, wq, bq, wk, bk, wv, bv, ws, bs)
    out = jax.block_until_ready(out)

    ref = reference(x, wq, bq, wk, bk, wv, bv, ws, bs)
    assert out.shape == (B, H)
    # Both sides now use exact softmax division and f32-precision matmuls, so
    # agreement is typically ~1e-6; the margin below only guards against
    # MXU multi-pass precision differences across TPU generations.
    assert jnp.allclose(out, ref, atol=2e-3, rtol=2e-3), "mismatch vs JAX reference"

    print("KERNEL_OK")
</pallas_src>

<mosaic_0001>
module attributes {stable_mosaic.version = 11 : i64} {
  func.func @temporal_attention_kernel(%arg0: i32, %arg1: memref<1x8x128xf32, #tpu.memory_space<vmem>>, %arg2: memref<128x128xf32, #tpu.memory_space<vmem>>, %arg3: memref<1x128xf32, #tpu.memory_space<vmem>>, %arg4: memref<1x128xf32, #tpu.memory_space<vmem>>, %arg5: memref<1x1xf32, #tpu.memory_space<smem>>, %arg6: memref<128x128xf32, #tpu.memory_space<vmem>>, %arg7: memref<1x128xf32, #tpu.memory_space<vmem>>, %arg8: memref<1x1x128xf32, #tpu.memory_space<vmem>>) attributes {dimension_semantics = [#tpu.dimension_semantics<parallel>], iteration_bounds = array<i64: 2>, scalar_prefetch = 0 : i64, scratch_operands = 0 : i64, tpu.core_type = #tpu.core_type<tc>, window_params = [{transform_indices = @transform_0, window_bounds = array<i64: 1, 8, 128>}, {pipeline_mode = #tpu.pipeline_mode<synchronous>, transform_indices = @transform_1, window_bounds = array<i64: 128, 128>}, {pipeline_mode = #tpu.pipeline_mode<synchronous>, transform_indices = @transform_2, window_bounds = array<i64: 1, 128>}, {pipeline_mode = #tpu.pipeline_mode<synchronous>, transform_indices = @transform_3, window_bounds = array<i64: 1, 128>}, {transform_indices = @transform_4, window_bounds = array<i64: 1, 1>}, {pipeline_mode = #tpu.pipeline_mode<synchronous>, transform_indices = @transform_5, window_bounds = array<i64: 128, 128>}, {pipeline_mode = #tpu.pipeline_mode<synchronous>, transform_indices = @transform_6, window_bounds = array<i64: 1, 128>}, {transform_indices = @transform_7, window_bounds = array<i64: 1, 1, 128>}]} {
    %c0 = arith.constant 0 : index
    %c0_0 = arith.constant 0 : index
    %c0_1 = arith.constant 0 : index
    %0 = vector.load %arg1[%c0, %c0_0, %c0_1] : memref<1x8x128xf32, #tpu.memory_space<vmem>>, vector<1x8x128xf32>
    %1 = vector.shape_cast %0 : vector<1x8x128xf32> to vector<8x128xf32>
    %c0_2 = arith.constant 0 : index
    %c0_3 = arith.constant 0 : index
    %2 = vector.load %arg2[%c0_2, %c0_3] : memref<128x128xf32, #tpu.memory_space<vmem>>, vector<128x128xf32>
    %cst = arith.constant dense<0.000000e+00> : vector<8x128xf32>
    %3 = tpu.matmul %1, %2, %cst {dimension_numbers = #tpu.dot_dimension_numbers<[1], [0], [0], [1], [0, 0, 1, 1], [], []>} : vector<8x128xf32>, vector<128x128xf32>, vector<8x128xf32> -> vector<8x128xf32>
    %c0_4 = arith.constant 0 : index
    %c0_5 = arith.constant 0 : index
    %4 = vector.load %arg3[%c0_4, %c0_5] : memref<1x128xf32, #tpu.memory_space<vmem>>, vector<1x128xf32>
    %5 = vector.broadcast %4 : vector<1x128xf32> to vector<8x128xf32>
    %6 = arith.addf %3, %5 : vector<8x128xf32>
    %7 = math.tanh %6 : vector<8x128xf32>
    %c0_6 = arith.constant 0 : index
    %c0_7 = arith.constant 0 : index
    %8 = vector.load %arg4[%c0_6, %c0_7] : memref<1x128xf32, #tpu.memory_space<vmem>>, vector<1x128xf32>
    %9 = vector.broadcast %8 : vector<1x128xf32> to vector<8x128xf32>
    %10 = arith.mulf %7, %9 : vector<8x128xf32>
    %cst_8 = arith.constant dense<0.000000e+00> : vector<8xf32>
    %11 = vector.multi_reduction <add>, %10, %cst_8 [1] : vector<8x128xf32> to vector<8xf32>
    %12 = vector.shape_cast %11 : vector<8xf32> to vector<8x1xf32>
    %c0_9 = arith.constant 0 : index
    %c0_10 = arith.constant 0 : index
    %13 = memref.load %arg5[%c0_9, %c0_10] : memref<1x1xf32, #tpu.memory_space<smem>>
    %14 = vector.broadcast %13 : f32 to vector<8x1xf32>
    %15 = arith.addf %12, %14 : vector<8x1xf32>
    %16 = vector.shape_cast %15 : vector<8x1xf32> to vector<1x8x1xf32>
    %cst_11 = arith.constant dense<0xFF800000> : vector<1x1xf32>
    %17 = vector.multi_reduction <maximumf>, %16, %cst_11 [1] : vector<1x8x1xf32> to vector<1x1xf32>
    %18 = vector.shape_cast %17 : vector<1x1xf32> to vector<1x1x1xf32>
    %19 = vector.broadcast %18 : vector<1x1x1xf32> to vector<1x8x1xf32>
    %20 = arith.subf %16, %19 : vector<1x8x1xf32>
    %21 = math.exp %20 : vector<1x8x1xf32>
    %cst_12 = arith.constant dense<0.000000e+00> : vector<1x1xf32>
    %22 = vector.multi_reduction <add>, %21, %cst_12 [1] : vector<1x8x1xf32> to vector<1x1xf32>
    %23 = vector.broadcast %21 : vector<1x8x1xf32> to vector<1x8x128xf32>
    %24 = arith.mulf %23, %0 : vector<1x8x128xf32>
    %cst_13 = arith.constant dense<0.000000e+00> : vector<1x128xf32>
    %25 = vector.multi_reduction <add>, %24, %cst_13 [1] : vector<1x8x128xf32> to vector<1x128xf32>
    %26 = vector.broadcast %22 : vector<1x1xf32> to vector<1x128xf32>
    %27 = arith.divf %25, %26 : vector<1x128xf32>
    %c0_14 = arith.constant 0 : index
    %c0_15 = arith.constant 0 : index
    %28 = vector.load %arg6[%c0_14, %c0_15] : memref<128x128xf32, #tpu.memory_space<vmem>>, vector<128x128xf32>
    %cst_16 = arith.constant dense<0.000000e+00> : vector<1x128xf32>
    %29 = tpu.matmul %27, %28, %cst_16 {dimension_numbers = #tpu.dot_dimension_numbers<[1], [0], [0], [1], [0, 0, 1, 1], [], []>} : vector<1x128xf32>, vector<128x128xf32>, vector<1x128xf32> -> vector<1x128xf32>
    %c0_17 = arith.constant 0 : index
    %c0_18 = arith.constant 0 : index
    %30 = vector.load %arg7[%c0_17, %c0_18] : memref<1x128xf32, #tpu.memory_space<vmem>>, vector<1x128xf32>
    %31 = arith.addf %29, %30 : vector<1x128xf32>
    %32 = vector.shape_cast %31 : vector<1x128xf32> to vector<1x1x128xf32>
    %c0_19 = arith.constant 0 : index
    %c0_20 = arith.constant 0 : index
    %c0_21 = arith.constant 0 : index
    %33 = vector.load %arg8[%c0_19, %c0_20, %c0_21] : memref<1x1x128xf32, #tpu.memory_space<vmem>>, vector<1x1x128xf32>
    tpu.vector_store %arg8[%c0_19, %c0_20, %c0_21], %32 {strides = array<i32>} : memref<1x1x128xf32, #tpu.memory_space<vmem>>, vector<1x1x128xf32>,
    return
  }
  func.func @transform_0(%arg0: i32) -> (i32, i32, i32) {
    %c0_i32 = arith.constant 0 : i32
    %c0_i32_0 = arith.constant 0 : i32
    %c0_i32_1 = arith.constant 0 : i32
    return %arg0, %c0_i32, %c0_i32_0 : i32, i32, i32
  }
  func.func @transform_1(%arg0: i32) -> (i32, i32) {
    %c0_i32 = arith.constant 0 : i32
    %c0_i32_0 = arith.constant 0 : i32
    %c0_i32_1 = arith.constant 0 : i32
    return %c0_i32, %c0_i32_0 : i32, i32
  }
  func.func @transform_2(%arg0: i32) -> (i32, i32) {
    %c0_i32 = arith.constant 0 : i32
    %c0_i32_0 = arith.constant 0 : i32
    %c0_i32_1 = arith.constant 0 : i32
    return %c0_i32, %c0_i32_0 : i32, i32
  }
  func.func @transform_3(%arg0: i32) -> (i32, i32) {
    %c0_i32 = arith.constant 0 : i32
    %c0_i32_0 = arith.constant 0 : i32
    %c0_i32_1 = arith.constant 0 : i32
    return %c0_i32, %c0_i32_0 : i32, i32
  }
  func.func @transform_4(%arg0: i32) -> (i32, i32) {
    %c0_i32 = arith.constant 0 : i32
    %c0_i32_0 = arith.constant 0 : i32
    %c0_i32_1 = arith.constant 0 : i32
    return %c0_i32, %c0_i32_0 : i32, i32
  }
  func.func @transform_5(%arg0: i32) -> (i32, i32) {
    %c0_i32 = arith.constant 0 : i32
    %c0_i32_0 = arith.constant 0 : i32
    %c0_i32_1 = arith.constant 0 : i32
    return %c0_i32, %c0_i32_0 : i32, i32
  }
  func.func @transform_6(%arg0: i32) -> (i32, i32) {
    %c0_i32 = arith.constant 0 : i32
    %c0_i32_0 = arith.constant 0 : i32
    %c0_i32_1 = arith.constant 0 : i32
    return %c0_i32, %c0_i32_0 : i32, i32
  }
  func.func @transform_7(%arg0: i32) -> (i32, i32, i32) {
    %c0_i32 = arith.constant 0 : i32
    %c0_i32_0 = arith.constant 0 : i32
    %c0_i32_1 = arith.constant 0 : i32
    return %arg0, %c0_i32, %c0_i32_0 : i32, i32, i32
  }
}

</mosaic_0001>

<llo_original>
// kernel: tpu_custom_call.1
$region0: #{tpu_custom_call.1}
  #allocation0 [shape = 'u32[]', space=smem, size = 0x4, offset = 0x4, fixed_abs, tag = 'smem constant byte address 0x4 - core index']
  #allocation1 [shape = 'u32[144,128]{1,0:T(1,128)}', space=vmem, size = 0x12000, scoped, tag = 'internal scratch']
  #allocation2 [shape = 'f32[1,1]{1,0:T(1,128)S(6)}', space=smem, size = 0x200, scoped, tag = 'scoped memory for tpu_custom_call.1']
  %s0 = inlined_call_operand.hbm [shape: f32[2,8,128], index: 0, kind: input, shape index: {}]
  %s1 = inlined_call_operand.hbm [shape: f32[128,128], index: 1, kind: input, shape index: {}]
  %s2 = inlined_call_operand.vmem [shape: f32[1,128], index: 2, kind: input, shape index: {}]
  %s3 = inlined_call_operand.vmem [shape: f32[1,128], index: 3, kind: input, shape index: {}]
  %s4 = inlined_call_operand.<no memory space> [shape: f32[1,1], index: 4, kind: input, shape index: {}]
  %s5 = inlined_call_operand.hbm [shape: f32[128,128], index: 5, kind: input, shape index: {}]
  %s6 = inlined_call_operand.vmem [shape: f32[1,128], index: 6, kind: input, shape index: {}]
  %s7 = inlined_call_operand.hbm [shape: f32[2,1,128], index: 7, kind: output, shape index: {}]
  %s8 = sld [smem:[#allocation0]]
  $region73: #{tpu_custom_call.1} parent=0
    _
  %s10 = ssub.s32 1, %s8
  %s11 = scalar_select 0, %s10, %s8
  %12 = sst [smem:[#allocation2]] %s4
  $region1: #{tpu_custom_call.1} parent=0
    #allocation3 [shape = 'u8[8192]{0}', space=vmem, size = 0x2000, scoped, tag = 'input window, operand 0']
    #allocation4 [shape = 's32[2]{0}', space=sflag, size = 0x8, scoped, tag = 'scoped memory for tpu_custom_call.1']
    #allocation5 [shape = 's32[2]{0}', space=sflag, size = 0x8, scoped, tag = 'scoped memory for tpu_custom_call.1']
    #allocation6 [shape = 'u8[65536]{0}', space=vmem, size = 0x10000, scoped, tag = 'input window, operand 1, single buffered']
    #allocation7 [shape = 's32[1]{0}', space=sflag, size = 0x4, scoped, tag = 'scoped memory for tpu_custom_call.1']
    #allocation8 [shape = 'u8[65536]{0}', space=vmem, size = 0x10000, scoped, tag = 'input window, operand 5, single buffered']
    #allocation9 [shape = 'u8[1024]{0}', space=vmem, size = 0x400, scoped, tag = 'output window, operand 0']
    %13 = vsyncpa [#allocation4], 0
    %s14 = scalar_lea.sflag [#allocation4], 1
    %15 = vsyncpa %s14, 0
    %16 = vsyncpa [#allocation7], 0
    %17 = vsyncpa [#allocation5], 0
    %s18 = scalar_lea.sflag [#allocation5], 1
    %19 = vsyncpa %s18, 0
    loop: start=0, step=1, limit=4
    $region2: #{tpu_custom_call.1} parent=1 // loop_pre_header
      _
    $region3: #{tpu_custom_call.1} parent=1 // loop_header
      %s21 = sphi 0, %s25
      %p22 = scmp.ge.s32.totalorder %s21, 4
      %s31 = sphi 0, %s33
      %s34 = sphi 0, %s31
      %s35 = sphi 0, %s34
      %s51 = sphi 0, %s35
      %s55 = sphi 0, %s55
      %s57 = sphi 0, %s55
      %s58 = sphi 0, %s57
      %s72 = sphi 0, %s58
      %s76 = sphi 0, %s76
      %s78 = sphi 0, %s76
      %s79 = sphi 0, %s78
      %s93 = sphi 0, %s79
      %s97 = sphi 0, %s97
      %s99 = sphi 0, %s97
      %s100 = sphi 0, %s99
      %s114 = sphi 0, %s100
      %s118 = sphi 0, %s118
      %s120 = sphi 0, %s118
      %s121 = sphi 0, %s120
      %s135 = sphi 0, %s121
      %s139 = sphi 0, %s139
      %s141 = sphi 0, %s139
      %s142 = sphi 0, %s141
      %s156 = sphi 0, %s142
      %s160 = sphi 0, %s160
      %s162 = sphi 0, %s160
      %s163 = sphi 0, %s162
      %s177 = sphi 0, %s163
      %s183 = sphi 0, %s185
      %s186 = sphi 0, %s183
      %s187 = sphi 0, %s186
      %s203 = sphi 0, %s187
    $region4: #{tpu_custom_call.1} parent=1 // loop_header_branch
      %24 = sbr.rel (%p22) target = $region8
    $region5: #{tpu_custom_call.1} parent=1 // loop_body
      %s26 = ssub.s32 %s21, 1
      %s27 = ssub.s32 %s21, 2
      %s28 = sadd.s32 %s21, 1
      %s29 = ssub.s32 %s21, %s28
      %p30 = scmp.eq.s32.totalorder %s29, 0
      %s32 = sadd.s32 %s31, 1
      %s33 = scalar_select %p30, %s31, %s32
      %p36 = pneg %p30
      %p37 = scmp.eq.s32.totalorder %s21, 1
      %p38 = por %p36, %p37
      %p39 = scmp.ne.s32.totalorder %s31, %s34
      %p40 = scmp.eq.s32.totalorder %s21, 0
      %p41 = por %p39, %p40
      %p42 = scmp.ne.s32.totalorder %s31, %s34
      %p43 = scmp.eq.s32.totalorder %s26, 1
      %p44 = por %p42, %p43
      %p45 = scmp.ne.s32.totalorder %s34, %s35
      %p46 = scmp.eq.s32.totalorder %s26, 0
      %p47 = por %p45, %p46
      %p48 = scmp.ne.s32.totalorder %s34, %s35
      %p49 = scmp.eq.s32.totalorder %s27, 1
      %p50 = por %p48, %p49
      %p52 = scmp.ne.s32.totalorder %s35, %s51
      %p53 = scmp.eq.s32.totalorder %s27, 0
      %p54 = por %p52, %p53
      %s56 = sadd.s32 %s55, 1
      %p59 = scmp.eq.s32.totalorder %s21, 1
      %p60 = scmp.ne.s32.totalorder %s55, %s57
      %p61 = scmp.eq.s32.totalorder %s21, 0
      %p62 = por %p60, %p61
      %p63 = scmp.ne.s32.totalorder %s55, %s57
      %p64 = scmp.eq.s32.totalorder %s26, 1
      %p65 = por %p63, %p64
      %p66 = scmp.ne.s32.totalorder %s57, %s58
      %p67 = scmp.eq.s32.totalorder %s26, 0
      %p68 = por %p66, %p67
      %p69 = scmp.ne.s32.totalorder %s57, %s58
      %p70 = scmp.eq.s32.totalorder %s27, 1
      %p71 = por %p69, %p70
      %p73 = scmp.ne.s32.totalorder %s58, %s72
      %p74 = scmp.eq.s32.totalorder %s27, 0
      %p75 = por %p73, %p74
      %s77 = sadd.s32 %s76, 1
      %p80 = scmp.eq.s32.totalorder %s21, 1
      %p81 = scmp.ne.s32.totalorder %s76, %s78
      %p82 = scmp.eq.s32.totalorder %s21, 0
      %p83 = por %p81, %p82
      %p84 = scmp.ne.s32.totalorder %s76, %s78
      %p85 = scmp.eq.s32.totalorder %s26, 1
      %p86 = por %p84, %p85
      %p87 = scmp.ne.s32.totalorder %s78, %s79
      %p88 = scmp.eq.s32.totalorder %s26, 0
      %p89 = por %p87, %p88
      %p90 = scmp.ne.s32.totalorder %s78, %s79
      %p91 = scmp.eq.s32.totalorder %s27, 1
      %p92 = por %p90, %p91
      %p94 = scmp.ne.s32.totalorder %s79, %s93
      %p95 = scmp.eq.s32.totalorder %s27, 0
      %p96 = por %p94, %p95
      %s98 = sadd.s32 %s97, 1
      %p101 = scmp.eq.s32.totalorder %s21, 1
      %p102 = scmp.ne.s32.totalorder %s97, %s99
      %p103 = scmp.eq.s32.totalorder %s21, 0
      %p104 = por %p102, %p103
      %p105 = scmp.ne.s32.totalorder %s97, %s99
      %p106 = scmp.eq.s32.totalorder %s26, 1
      %p107 = por %p105, %p106
      %p108 = scmp.ne.s32.totalorder %s99, %s100
      %p109 = scmp.eq.s32.totalorder %s26, 0
      %p110 = por %p108, %p109
      %p111 = scmp.ne.s32.totalorder %s99, %s100
      %p112 = scmp.eq.s32.totalorder %s27, 1
      %p113 = por %p111, %p112
      %p115 = scmp.ne.s32.totalorder %s100, %s114
      %p116 = scmp.eq.s32.totalorder %s27, 0
      %p117 = por %p115, %p116
      %s119 = sadd.s32 %s118, 1
      %p122 = scmp.eq.s32.totalorder %s21, 1
      %p123 = scmp.ne.s32.totalorder %s118, %s120
      %p124 = scmp.eq.s32.totalorder %s21, 0
      %p125 = por %p123, %p124
      %p126 = scmp.ne.s32.totalorder %s118, %s120
      %p127 = scmp.eq.s32.totalorder %s26, 1
      %p128 = por %p126, %p127
      %p129 = scmp.ne.s32.totalorder %s120, %s121
      %p130 = scmp.eq.s32.totalorder %s26, 0
      %p131 = por %p129, %p130
      %p132 = scmp.ne.s32.totalorder %s120, %s121
      %p133 = scmp.eq.s32.totalorder %s27, 1
      %p134 = por %p132, %p133
      %p136 = scmp.ne.s32.totalorder %s121, %s135
      %p137 = scmp.eq.s32.totalorder %s27, 0
      %p138 = por %p136, %p137
      %s140 = sadd.s32 %s139, 1
      %p143 = scmp.eq.s32.totalorder %s21, 1
      %p144 = scmp.ne.s32.totalorder %s139, %s141
      %p145 = scmp.eq.s32.totalorder %s21, 0
      %p146 = por %p144, %p145
      %p147 = scmp.ne.s32.totalorder %s139, %s141
      %p148 = scmp.eq.s32.totalorder %s26, 1
      %p149 = por %p147, %p148
      %p150 = scmp.ne.s32.totalorder %s141, %s142
      %p151 = scmp.eq.s32.totalorder %s26, 0
      %p152 = por %p150, %p151
      %p153 = scmp.ne.s32.totalorder %s141, %s142
      %p154 = scmp.eq.s32.totalorder %s27, 1
      %p155 = por %p153, %p154
      %p157 = scmp.ne.s32.totalorder %s142, %s156
      %p158 = scmp.eq.s32.totalorder %s27, 0
      %p159 = por %p157, %p158
      %s161 = sadd.s32 %s160, 1
      %p164 = scmp.eq.s32.totalorder %s21, 1
      %p165 = scmp.ne.s32.totalorder %s160, %s162
      %p166 = scmp.eq.s32.totalorder %s21, 0
      %p167 = por %p165, %p166
      %p168 = scmp.ne.s32.totalorder %s160, %s162
      %p169 = scmp.eq.s32.totalorder %s26, 1
      %p170 = por %p168, %p169
      %p171 = scmp.ne.s32.totalorder %s162, %s163
      %p172 = scmp.eq.s32.totalorder %s26, 0
      %p173 = por %p171, %p172
      %p174 = scmp.ne.s32.totalorder %s162, %s163
      %p175 = scmp.eq.s32.totalorder %s27, 1
      %p176 = por %p174, %p175
      %p178 = scmp.ne.s32.totalorder %s163, %s177
      %p179 = scmp.eq.s32.totalorder %s27, 0
      %p180 = por %p178, %p179
      %s181 = ssub.s32 %s21, %s28
      %p182 = scmp.eq.s32.totalorder %s181, 0
      %s184 = sadd.s32 %s183, 1
      %s185 = scalar_select %p182, %s183, %s184
      %p188 = pneg %p182
      %p189 = scmp.eq.s32.totalorder %s21, 1
      %p190 = por %p188, %p189
      %p191 = scmp.ne.s32.totalorder %s183, %s186
      %p192 = scmp.eq.s32.totalorder %s21, 0
      %p193 = por %p191, %p192
      %p194 = scmp.ne.s32.totalorder %s183, %s186
      %p195 = scmp.eq.s32.totalorder %s26, 1
      %p196 = por %p194, %p195
      %p197 = scmp.ne.s32.totalorder %s186, %s187
      %p198 = scmp.eq.s32.totalorder %s26, 0
      %p199 = por %p197, %p198
      %p200 = scmp.ne.s32.totalorder %s186, %s187
      %p201 = scmp.eq.s32.totalorder %s27, 1
      %p202 = por %p200, %p201
      %p204 = scmp.ne.s32.totalorder %s187, %s203
      %p205 = scmp.eq.s32.totalorder %s27, 0
      %p206 = por %p204, %p205
      %p207 = scmp.le.s32.totalorder 1, %s21
      %p208 = scmp.lt.s32.totalorder %s21, 3
      %p209 = pnand %p207, %p208
      %p210 = pneg %p209
      // Predicated region
      $region9: #{tpu_custom_call.1} parent=5 // pred_check
        _
      $region10: #{tpu_custom_call.1} parent=5 // pred_check_branch
        %212 = sbr.rel (%p209) target = $region12
      $region11: #{tpu_custom_call.1} parent=5 // pred_region
        %s213 = ssub.s32 %s21, 1
        // Predicated region
        $region13: #{tpu_custom_call.1} parent=11 // pred_check
          %p214 = pneg %p68
        $region14: #{tpu_custom_call.1} parent=11 // pred_check_branch
          %216 = sbr.rel (%p214) target = $region16
        $region15: #{tpu_custom_call.1} parent=11 // pred_region
          %s218 = ssub.s32 2048, 2048
          %219 = vsyncadd [#allocation7], %s218
          %s220 = sshll.u32 [#allocation6], 4
          %s221 = int_to_ptr.vmem [resolvable:$true] %s220
          %226 = dma.hbm_to_vmem [thread:$0]  %s1, 2048, %s221, [#allocation7], 128, 128, 8
        $region16: #{tpu_custom_call.1} parent=11 // pred_fallthru
          _
        // Predicated region
        $region17: #{tpu_custom_call.1} parent=11 // pred_check
          %p227 = pneg %p89
        $region18: #{tpu_custom_call.1} parent=11 // pred_check_branch
          %229 = sbr.rel (%p227) target = $region20
        $region19: #{tpu_custom_call.1} parent=11 // pred_region
          _
        $region20: #{tpu_custom_call.1} parent=11 // pred_fallthru
          _
        // Predicated region
        $region21: #{tpu_custom_call.1} parent=11 // pred_check
          %p230 = pneg %p110
        $region22: #{tpu_custom_call.1} parent=11 // pred_check_branch
          %232 = sbr.rel (%p230) target = $region24
        $region23: #{tpu_custom_call.1} parent=11 // pred_region
          _
        $region24: #{tpu_custom_call.1} parent=11 // pred_fallthru
          _
        // Predicated region
        $region25: #{tpu_custom_call.1} parent=11 // pred_check
          %p233 = pneg %p131
        $region26: #{tpu_custom_call.1} parent=11 // pred_check_branch
          %235 = sbr.rel (%p233) target = $region28
        $region27: #{tpu_custom_call.1} parent=11 // pred_region
          _
        $region28: #{tpu_custom_call.1} parent=11 // pred_fallthru
          _
        // Predicated region
        $region29: #{tpu_custom_call.1} parent=11 // pred_check
          %p236 = pneg %p152
        $region30: #{tpu_custom_call.1} parent=11 // pred_check_branch
          %238 = sbr.rel (%p236) target = $region32
        $region31: #{tpu_custom_call.1} parent=11 // pred_region
          %s240 = ssub.s32 2048, 2048
          %241 = vsyncadd [#allocation7], %s240
          %s242 = sshll.u32 [#allocation8], 4
          %s243 = int_to_ptr.vmem [resolvable:$true] %s242
          %248 = dma.hbm_to_vmem [thread:$0]  %s5, 2048, %s243, [#allocation7], 128, 128, 8
        $region32: #{tpu_custom_call.1} parent=11 // pred_fallthru
          _
        // Predicated region
        $region33: #{tpu_custom_call.1} parent=11 // pred_check
          %p249 = pneg %p173
        $region34: #{tpu_custom_call.1} parent=11 // pred_check_branch
          %251 = sbr.rel (%p249) target = $region36
        $region35: #{tpu_custom_call.1} parent=11 // pred_region
          _
        $region36: #{tpu_custom_call.1} parent=11 // pred_fallthru
          _
      $region12: #{tpu_custom_call.1} parent=5 // pred_fallthru
        _
      %p252 = scmp.lt.s32.totalorder %s21, 2
      // Predicated region
      $region37: #{tpu_custom_call.1} parent=5 // pred_check
        %p253 = pneg %p252
      $region38: #{tpu_custom_call.1} parent=5 // pred_check_branch
        %255 = sbr.rel (%p253) target = $region40
      $region39: #{tpu_custom_call.1} parent=5 // pred_region
        // Predicated region
        $region41: #{tpu_custom_call.1} parent=39 // pred_check
          %p256 = pneg %p41
        $region42: #{tpu_custom_call.1} parent=39 // pred_check_branch
          %258 = sbr.rel (%p256) target = $region44
        $region43: #{tpu_custom_call.1} parent=39 // pred_region
          %s259 = sand.u32 %s31, 1
          %s260 = scalar_lea.sflag [#allocation4], %s259
          %s261 = sand.u32 %s31, 1
          %s262 = smul.addr %s261, 8
          %s263 = scalar_lea.vmem [#allocation3], %s262
          %s265 = ssub.s32 128, 128
          %266 = vsyncadd %s260, %s265
          %s267 = smul.addr %s21, 128
          %s268 = scalar_lea.hbm %s0, %s267
          %s270 = sshll.u32 %s263, 4
          %s271 = int_to_ptr.vmem [resolvable:$true] %s270
          %273 = dma.hbm_to_vmem [thread:$0]  %s268, 128, %s271, %s260
        $region44: #{tpu_custom_call.1} parent=39 // pred_fallthru
          _
      $region40: #{tpu_custom_call.1} parent=5 // pred_fallthru
        _
      %p274 = scmp.le.s32.totalorder 1, %s21
      %p275 = scmp.lt.s32.totalorder %s21, 3
      %p276 = pnand %p274, %p275
      %p277 = pneg %p276
      // Predicated region
      $region45: #{tpu_custom_call.1} parent=5 // pred_check
        _
      $region46: #{tpu_custom_call.1} parent=5 // pred_check_branch
        %279 = sbr.rel (%p276) target = $region48
      $region47: #{tpu_custom_call.1} parent=5 // pred_region
        %s280 = ssub.s32 %s21, 1
        %s281 = sand.u32 %s34, 1
        %s282 = scalar_lea.sflag [#allocation4], %s281
        %s283 = sand.u32 %s34, 1
        %s284 = smul.addr %s283, 8
        %s285 = scalar_lea.vmem [#allocation3], %s284
        // Predicated region
        $region49: #{tpu_custom_call.1} parent=47 // pred_check
          %p286 = pneg %p47
        $region50: #{tpu_custom_call.1} parent=47 // pred_check_branch
          %288 = sbr.rel (%p286) target = $region52
        $region51: #{tpu_custom_call.1} parent=47 // pred_region
          %289 = dma.done %s282, 128
        $region52: #{tpu_custom_call.1} parent=47 // pred_fallthru
          _
        // Predicated region
        $region53: #{tpu_custom_call.1} parent=47 // pred_check
          %p290 = pneg %p68
        $region54: #{tpu_custom_call.1} parent=47 // pred_check_branch
          %292 = sbr.rel (%p290) target = $region56
        $region55: #{tpu_custom_call.1} parent=47 // pred_region
          %293 = dma.done [#allocation7], 2048
        $region56: #{tpu_custom_call.1} parent=47 // pred_fallthru
          _
        // Predicated region
        $region57: #{tpu_custom_call.1} parent=47 // pred_check
          %p294 = pneg %p152
        $region58: #{tpu_custom_call.1} parent=47 // pred_check_branch
          %296 = sbr.rel (%p294) target = $region60
        $region59: #{tpu_custom_call.1} parent=47 // pred_region
          %297 = dma.done [#allocation7], 2048
        $region60: #{tpu_custom_call.1} parent=47 // pred_fallthru
          _
        %s298 = sand.u32 %s34, 1
        %s299 = scalar_lea.sflag [#allocation4], %s298
        %s300 = sand.u32 %s34, 1
        %s301 = smul.addr %s300, 8
        %s302 = scalar_lea.vmem [#allocation3], %s301
        %p303 = pneg %p47
        %p304 = pneg %p44
        %p305 = pneg %p68
        %p306 = pneg %p65
        %p307 = pneg %p89
        %p308 = pneg %p86
        %p309 = pneg %p110
        %p310 = pneg %p107
        %p311 = pneg %p131
        %p312 = pneg %p128
        %p313 = pneg %p152
        %p314 = pneg %p149
        %p315 = pneg %p173
        %p316 = pneg %p170
        %p317 = pneg %p199
        %p318 = pneg %p196
        %s319 = sand.u32 %s186, 1
        %s320 = scalar_lea.sflag [#allocation5], %s319
        %s321 = sand.u32 %s186, 1
        %s322 = scalar_lea.vmem [#allocation9], %s321
        %v323 = vld [vmem:[%s285] sm:$0xff]
        %v324 = vld [vmem:[#allocation6] sm:$0xff]
        %v325 = vld [vmem:[#allocation6 + $0x8] sm:$0xff]
        %v326 = vld [vmem:[#allocation6 + $0x10] sm:$0xff]
        %v327 = vld [vmem:[#allocation6 + $0x18] sm:$0xff]
        %v328 = vld [vmem:[#allocation6 + $0x20] sm:$0xff]
        %v329 = vld [vmem:[#allocation6 + $0x28] sm:$0xff]
        %v330 = vld [vmem:[#allocation6 + $0x30] sm:$0xff]
        %v331 = vld [vmem:[#allocation6 + $0x38] sm:$0xff]
        %v332 = vld [vmem:[#allocation6 + $0x40] sm:$0xff]
        %v333 = vld [vmem:[#allocation6 + $0x48] sm:$0xff]
        %v334 = vld [vmem:[#allocation6 + $0x50] sm:$0xff]
        %v335 = vld [vmem:[#allocation6 + $0x58] sm:$0xff]
        %v336 = vld [vmem:[#allocation6 + $0x60] sm:$0xff]
        %v337 = vld [vmem:[#allocation6 + $0x68] sm:$0xff]
        %v338 = vld [vmem:[#allocation6 + $0x70] sm:$0xff]
        %v339 = vld [vmem:[#allocation6 + $0x78] sm:$0xff]
        %v340 = vld [vmem:[%s2] sm:$0x1]
        %v342 = vlaneseq
        %v343 = vshrl.u32 %v342, 7
        %v344 = vsub.s32 0, %v343
        %v345 = vrot.slane %v340, %v344
        %347 = vmatprep.subr.mxu0 0.0
        %348 = vmatpush1.msra.mxu0 %v324
        %349 = vmatprep.subr.mxu0 0.0
        %350 = vmatpush1.msra.mxu0 %v325
        %351 = vmatprep.subr.mxu0 0.0
        %352 = vmatpush1.msra.mxu0 %v326
        %353 = vmatprep.subr.mxu0 0.0
        %354 = vmatpush1.msra.mxu0 %v327
        %355 = vmatprep.subr.mxu0 0.0
        %356 = vmatpush1.msra.mxu0 %v328
        %357 = vmatprep.subr.mxu0 0.0
        %358 = vmatpush1.msra.mxu0 %v329
        %359 = vmatprep.subr.mxu0 0.0
        %360 = vmatpush1.msra.mxu0 %v330
        %361 = vmatprep.subr.mxu0 0.0
        %362 = vmatpush1.msra.mxu0 %v331
        %363 = vmatprep.subr.mxu0 0.0
        %364 = vmatpush1.msra.mxu0 %v332
        %365 = vmatprep.subr.mxu0 0.0
        %366 = vmatpush1.msra.mxu0 %v333
        %367 = vmatprep.subr.mxu0 0.0
        %368 = vmatpush1.msra.mxu0 %v334
        %369 = vmatprep.subr.mxu0 0.0
        %370 = vmatpush1.msra.mxu0 %v335
        %371 = vmatprep.subr.mxu0 0.0
        %372 = vmatpush1.msra.mxu0 %v336
        %373 = vmatprep.subr.mxu0 0.0
        %374 = vmatpush1.msra.mxu0 %v337
        %375 = vmatprep.subr.mxu0 0.0
        %376 = vmatpush1.msra.mxu0 %v338
        %377 = vmatprep.subr.mxu0 0.0
        %378 = vmatpush1.msra.mxu0 %v339
        %379 = vmatprep.subr.mxu0 0.0
        %380 = vmatpush1.msra.mxu0 0.0
        %381 = vmatprep.subr.mxu0 0.0
        %382 = vmatpush1.msra.mxu0 0.0
        %383 = vmatprep.subr.mxu0 0.0
        %384 = vmatpush1.msra.mxu0 0.0
        %385 = vmatprep.subr.mxu0 0.0
        %386 = vmatpush1.msra.mxu0 0.0
        %387 = vmatprep.subr.mxu0 0.0
        %388 = vmatpush1.msra.mxu0 0.0
        %389 = vmatprep.subr.mxu0 0.0
        %390 = vmatpush1.msra.mxu0 0.0
        %391 = vmatprep.subr.mxu0 0.0
        %392 = vmatpush1.msra.mxu0 0.0
        %393 = vmatprep.subr.mxu0 0.0
        %394 = vmatpush1.msra.mxu0 0.0
        %395 = vmatprep.subr.mxu0 0.0
        %396 = vmatpush1.msra.mxu0 0.0
        %397 = vmatprep.subr.mxu0 0.0
        %398 = vmatpush1.msra.mxu0 0.0
        %399 = vmatprep.subr.mxu0 0.0
        %400 = vmatpush1.msra.mxu0 0.0
        %401 = vmatprep.subr.mxu0 0.0
        %402 = vmatpush1.msra.mxu0 0.0
        %403 = vmatprep.subr.mxu0 0.0
        %404 = vmatpush1.msra.mxu0 0.0
        %405 = vmatprep.subr.mxu0 0.0
        %406 = vmatpush1.msra.mxu0 0.0
        %407 = vmatprep.subr.mxu0 0.0
        %408 = vmatpush1.msra.mxu0 0.0
        %409 = vmatprep.subr.mxu0 0.0
        %410 = vmatpush1.msra.mxu0 0.0
        %411 = vmatprep.mubr.f32.mxu0 0.0
        %412 = vmatmul.mubr.f32.gmra.mrb[0].mxu0 %v323
        %v413 = vpop.f32.mrb[0].mxu0
        %v414 = vadd.f32 %v345, %v413
        %v415 = vpop.f32.mrb[0].mxu0
        %416 = vdwg.mxu0
        %v417 = vtanh.pop %v414
        %v418 = vld [vmem:[%s3] sm:$0x1]
        %v420 = vlaneseq
        %v421 = vshrl.u32 %v420, 7
        %v422 = vsub.s32 0, %v421
        %v423 = vrot.slane %v418, %v422
        %v425 = vmul.f32 %v417, %v423
        %426 = vadd.xlane.f32.xlu0 %v425
        %v427 = vpop.xlane.xlu0 %426
        %s428 = sld [smem:[#allocation2]]
        %v429 = vstv %s428
        %v430 = vadd.f32 %v427, %v429
        %v431 = vrot.slane %v430, 4
        %v432 = vmax.f32 %v430, %v431
        %v433 = vrot.slane %v432, 2
        %v434 = vmax.f32 %v432, %v433
        %v435 = vrot.slane %v434, 1
        %v436 = vmax.f32 %v434, %v435
        %v437 = vsub.f32 %v430, %v436
        %v438 = vmul.f32 %v437, 1.442695
        %v439 = vpow.pop %v438
        %v440 = vrot.slane %v439, 4
        %v441 = vadd.f32 %v439, %v440
        %v442 = vrot.slane %v441, 2
        %v443 = vadd.f32 %v441, %v442
        %v444 = vrot.slane %v443, 1
        %v445 = vadd.f32 %v443, %v444
        %v446 = vmul.f32 %v439, %v323
        %v447 = vrot.slane %v446, 4
        %v448 = vadd.f32 %v446, %v447
        %v449 = vrot.slane %v448, 2
        %v450 = vadd.f32 %v448, %v449
        %v451 = vrot.slane %v450, 1
        %v452 = vadd.f32 %v450, %v451
        %v453 = vrcp.pop %v445
        %v454 = vmul.f32 %v452, %v453
        %v455 = vld [vmem:[#allocation8] sm:$0xff]
        %v456 = vld [vmem:[#allocation8 + $0x8] sm:$0xff]
        %v457 = vld [vmem:[#allocation8 + $0x10] sm:$0xff]
        %v458 = vld [vmem:[#allocation8 + $0x18] sm:$0xff]
        %v459 = vld [vmem:[#allocation8 + $0x20] sm:$0xff]
        %v460 = vld [vmem:[#allocation8 + $0x28] sm:$0xff]
        %v461 = vld [vmem:[#allocation8 + $0x30] sm:$0xff]
        %v462 = vld [vmem:[#allocation8 + $0x38] sm:$0xff]
        %v463 = vld [vmem:[#allocation8 + $0x40] sm:$0xff]
        %v464 = vld [vmem:[#allocation8 + $0x48] sm:$0xff]
        %v465 = vld [vmem:[#allocation8 + $0x50] sm:$0xff]
        %v466 = vld [vmem:[#allocation8 + $0x58] sm:$0xff]
        %v467 = vld [vmem:[#allocation8 + $0x60] sm:$0xff]
        %v468 = vld [vmem:[#allocation8 + $0x68] sm:$0xff]
        %v469 = vld [vmem:[#allocation8 + $0x70] sm:$0xff]
        %v470 = vld [vmem:[#allocation8 + $0x78] sm:$0xff]
        %v471 = vld [vmem:[%s6] sm:$0x1]
        %472 = vmatprep.subr.mxu0 0.0
        %473 = vmatpush1.msra.mxu0 %v455
        %474 = vmatprep.subr.mxu0 0.0
        %475 = vmatpush1.msra.mxu0 %v456
        %476 = vmatprep.subr.mxu0 0.0
        %477 = vmatpush1.msra.mxu0 %v457
        %478 = vmatprep.subr.mxu0 0.0
        %479 = vmatpush1.msra.mxu0 %v458
        %480 = vmatprep.subr.mxu0 0.0
        %481 = vmatpush1.msra.mxu0 %v459
        %482 = vmatprep.subr.mxu0 0.0
        %483 = vmatpush1.msra.mxu0 %v460
        %484 = vmatprep.subr.mxu0 0.0
        %485 = vmatpush1.msra.mxu0 %v461
        %486 = vmatprep.subr.mxu0 0.0
        %487 = vmatpush1.msra.mxu0 %v462
        %488 = vmatprep.subr.mxu0 0.0
        %489 = vmatpush1.msra.mxu0 %v463
        %490 = vmatprep.subr.mxu0 0.0
        %491 = vmatpush1.msra.mxu0 %v464
        %492 = vmatprep.subr.mxu0 0.0
        %493 = vmatpush1.msra.mxu0 %v465
        %494 = vmatprep.subr.mxu0 0.0
        %495 = vmatpush1.msra.mxu0 %v466
        %496 = vmatprep.subr.mxu0 0.0
        %497 = vmatpush1.msra.mxu0 %v467
        %498 = vmatprep.subr.mxu0 0.0
        %499 = vmatpush1.msra.mxu0 %v468
        %500 = vmatprep.subr.mxu0 0.0
        %501 = vmatpush1.msra.mxu0 %v469
        %502 = vmatprep.subr.mxu0 0.0
        %503 = vmatpush1.msra.mxu0 %v470
        %504 = vmatprep.subr.mxu0 0.0
        %505 = vmatpush1.msra.mxu0 0.0
        %506 = vmatprep.subr.mxu0 0.0
        %507 = vmatpush1.msra.mxu0 0.0
        %508 = vmatprep.subr.mxu0 0.0
        %509 = vmatpush1.msra.mxu0 0.0
        %510 = vmatprep.subr.mxu0 0.0
        %511 = vmatpush1.msra.mxu0 0.0
        %512 = vmatprep.subr.mxu0 0.0
        %513 = vmatpush1.msra.mxu0 0.0
        %514 = vmatprep.subr.mxu0 0.0
        %515 = vmatpush1.msra.mxu0 0.0
        %516 = vmatprep.subr.mxu0 0.0
        %517 = vmatpush1.msra.mxu0 0.0
        %518 = vmatprep.subr.mxu0 0.0
        %519 = vmatpush1.msra.mxu0 0.0
        %520 = vmatprep.subr.mxu0 0.0
        %521 = vmatpush1.msra.mxu0 0.0
        %522 = vmatprep.subr.mxu0 0.0
        %523 = vmatpush1.msra.mxu0 0.0
        %524 = vmatprep.subr.mxu0 0.0
        %525 = vmatpush1.msra.mxu0 0.0
        %526 = vmatprep.subr.mxu0 0.0
        %527 = vmatpush1.msra.mxu0 0.0
        %528 = vmatprep.subr.mxu0 0.0
        %529 = vmatpush1.msra.mxu0 0.0
        %530 = vmatprep.subr.mxu0 0.0
        %531 = vmatpush1.msra.mxu0 0.0
        %532 = vmatprep.subr.mxu0 0.0
        %533 = vmatpush1.msra.mxu0 0.0
        %534 = vmatprep.subr.mxu0 0.0
        %535 = vmatpush1.msra.mxu0 0.0
        %536 = vmatprep.mubr.f32.mxu0 0.0
        %537 = vmatmul.mubr.f32.gmra.mrb[0].mxu0 %v454
        %v538 = vpop.f32.mrb[0].mxu0
        %v539 = vadd.f32 %v471, %v538
        %v540 = vpop.f32.mrb[0].mxu0
        %541 = vdwg.mxu0
        %542 = vst [vmem:[%s322] sm:$0x1] %v539
        %s543 = sand.u32 %s186, 1
        %s544 = scalar_lea.sflag [#allocation5], %s543
        %s545 = sand.u32 %s186, 1
        %s546 = scalar_lea.vmem [#allocation9], %s545
        // Predicated region
        $region61: #{tpu_custom_call.1} parent=47 // pred_check
          %p547 = pneg %p196
        $region62: #{tpu_custom_call.1} parent=47 // pred_check_branch
          %549 = sbr.rel (%p547) target = $region64
        $region63: #{tpu_custom_call.1} parent=47 // pred_region
          %s551 = ssub.s32 16, 16
          %552 = vsyncadd %s544, %s551
          %s553 = smul.addr %s26, 16
          %s554 = scalar_lea.hbm %s7, %s553
          %s556 = sshll.u32 %s546, 4
          %s557 = int_to_ptr.vmem [resolvable:$true] %s556
          %559 = dma.vmem_to_hbm [thread:$0]  %s557, 16, %s554, %s544
        $region64: #{tpu_custom_call.1} parent=47 // pred_fallthru
          _
      $region48: #{tpu_custom_call.1} parent=5 // pred_fallthru
        _
      %p560 = scmp.le.s32.totalorder 2, %s21
      // Predicated region
      $region65: #{tpu_custom_call.1} parent=5 // pred_check
        %p561 = pneg %p560
      $region66: #{tpu_custom_call.1} parent=5 // pred_check_branch
        %563 = sbr.rel (%p561) target = $region68
      $region67: #{tpu_custom_call.1} parent=5 // pred_region
        %s564 = ssub.s32 %s21, 2
        // Predicated region
        $region69: #{tpu_custom_call.1} parent=67 // pred_check
          %p565 = pneg %p202
        $region70: #{tpu_custom_call.1} parent=67 // pred_check_branch
          %567 = sbr.rel (%p565) target = $region72
        $region71: #{tpu_custom_call.1} parent=67 // pred_region
          %s568 = sand.u32 %s187, 1
          %s569 = scalar_lea.sflag [#allocation5], %s568
          %s570 = sand.u32 %s187, 1
          %s571 = scalar_lea.vmem [#allocation9], %s570
          %572 = dma.done %s569, 16
        $region72: #{tpu_custom_call.1} parent=67 // pred_fallthru
          _
      $region68: #{tpu_custom_call.1} parent=5 // pred_fallthru
        _
    $region6: #{tpu_custom_call.1} parent=1 // loop_footer
      %s25 = sadd.s32 1, %s21
    $region7: #{tpu_custom_call.1} parent=1 // loop_footer_branch
      %20 = sbr.rel target = $region3
    $region8: #{tpu_custom_call.1} parent=1 // loop_exit
      _
    %573 = vsyncpa [#allocation4], 1
    %s574 = scalar_lea.sflag [#allocation4], 1
    %575 = vsyncpa %s574, 1
    %576 = vsyncpa [#allocation7], 1
    %577 = vsyncpa [#allocation5], 1
    %s578 = scalar_lea.sflag [#allocation5], 1
    %579 = vsyncpa %s578, 1

</llo_original>
